<compile_context>
chip_gen: v7x
topology: tpu7x:2x2x1
jax: 0.10.0
libtpu: 0.0.40
codegen_flags: <defaults>
</compile_context>

<pallas_src>
from functools import partial

import jax
import jax.numpy as jnp
from jax.experimental import pallas as pl
from jax.experimental.pallas import tpu as pltpu


# ------------------------------------ tiling / VMEM budget ------------------------------------ #

def _vmem_budget_bytes():
    """Per-TensorCore VMEM budget (bytes) with headroom; conservative fallback = v7x 64 MiB."""
    try:
        cap = int(pltpu.get_tpu_info().vmem_capacity_bytes)
    except Exception:
        cap = 64 * 1024 * 1024
    return (cap * 3) // 4


def _pick_tiles(batch, n, m, w_itemsize, budget_bytes):
    # Batch tile: whole batch when small (single inner step), else 256-row tiles.
    tb = batch if batch <= 256 else 256
    if n <= 128:
        return tb, n
    def tile_bytes(tn):
        # Double-buffered pipeline buffers for every streamed operand + output.
        return 2 * (tb * n * 4              # x tile (f32, full contraction)
                    + n * tn * w_itemsize   # A^T column tile
                    + m * tn * w_itemsize   # B^T column tile
                    + n * m * w_itemsize    # K^T (resident)
                    + tn * w_itemsize       # b_bias tile
                    + tb * tn * 4)          # f output tile (f32)
    tn = min(((n + 127) // 128) * 128, 1024)
    while tn > 128 and tile_bytes(tn) > budget_bytes:
        tn -= 128
    return tb, tn


# ------------------------------ fused kernel (controller in-kernel) --------------------------- #

def _fused_kernel(sin_t_ref, x_ref, At_ref, Bt_ref, Kt_ref, bb_ref, f_ref):
    w_dtype = At_ref.dtype
    x = x_ref[...]                                                    # (tb, n) f32
    xw = x.astype(w_dtype)                                            # MXU-native operand
    # Controller core: tanh(x @ K^T), f32 accumulate, EUP tanh.  Recomputed per column
    # tile (cost ~ m/tn of the main matmul) so the j axis stays fully parallel.
    uw = jnp.tanh(
        jnp.dot(xw, Kt_ref[...], preferred_element_type=jnp.float32)
    ).astype(w_dtype)                                                 # (tb, m)
    # Dynamics: f = x @ A^T + tanh(xK^T) @ B^T + sin(t) * b_bias  (f32 accumulate).
    ax = jnp.dot(xw, At_ref[...], preferred_element_type=jnp.float32)  # (tb, tn)
    bu = jnp.dot(uw, Bt_ref[...], preferred_element_type=jnp.float32)  # (tb, tn)
    bias = sin_t_ref[0] * bb_ref[...].astype(jnp.float32)              # (1, tn)
    f_ref[...] = (ax + bu + bias).astype(f_ref.dtype)


@jax.jit
def _fused_rhs(t, x, At, Bt, Kt, b_bias):
    batch, n = x.shape
    m = Bt.shape[0]
    w_itemsize = jnp.dtype(At.dtype).itemsize
    budget = _vmem_budget_bytes()
    tb, tn = _pick_tiles(batch, n, m, w_itemsize, budget)
    # Grid: column tiles OUTER, batch tiles INNER -> each A^T / B^T / bias column tile is
    # fetched once and reused across every batch tile.
    grid = (pl.cdiv(n, tn), pl.cdiv(batch, tb))
    sin_t = jnp.sin(t).astype(jnp.float32).reshape(1)                 # scalar -> SMEM

    return pl.pallas_call(
        _fused_kernel,
        out_shape=jax.ShapeDtypeStruct((batch, n), x.dtype),
        grid_spec=pltpu.PrefetchScalarGridSpec(
            num_scalar_prefetch=0,
            grid=grid,
            in_specs=[
                pl.BlockSpec(memory_space=pltpu.MemorySpace.SMEM),    # sin(t) scalar
                pl.BlockSpec((tb, n), lambda j, i: (i, 0)),           # x tile (full contraction)
                pl.BlockSpec((n, tn), lambda j, i: (0, j)),           # A^T column tile (outer-indexed)
                pl.BlockSpec((m, tn), lambda j, i: (0, j)),           # B^T column tile
                pl.BlockSpec((n, m), lambda j, i: (0, 0)),            # K^T resident
                pl.BlockSpec((1, tn), lambda j, i: (0, j)),           # b_bias tile
            ],
            out_specs=pl.BlockSpec((tb, tn), lambda j, i: (i, j)),    # f (lane-dense)
        ),
        compiler_params=pltpu.CompilerParams(
            dimension_semantics=("parallel", "parallel"),             # both axes megacore-shardable
            vmem_limit_bytes=int(budget),
        ),
    )(sin_t, x, At, Bt, Kt, b_bias)


@partial(jax.jit, static_argnames=("steps",))
def _fused_euler_rollout(t0, dt, x0, At, Bt, Kt, b_bias, *, steps):
    """On-device ODE hot loop (review #9): one scan, no per-step Python dispatch."""
    def step(x, i):
        f = _fused_rhs(t0 + i * dt, x, At, Bt, Kt, b_bias)
        return x + dt * f, None
    xT, _ = jax.lax.scan(step, x0, jnp.arange(steps, dtype=jnp.float32))
    return xT


# ------------------------ unfused fallback (black-box controller u(t, x)) --------------------- #

def _linear_kernel(x_ref, u_ref, At_ref, Bt_ref, f_ref):
    w_dtype = At_ref.dtype
    ax = jnp.dot(x_ref[...].astype(w_dtype), At_ref[...], preferred_element_type=jnp.float32)
    bu = jnp.dot(u_ref[...].astype(w_dtype), Bt_ref[...], preferred_element_type=jnp.float32)
    f_ref[...] = (ax + bu).astype(f_ref.dtype)


@jax.jit
def _linear_rhs(x, u_val, At, Bt):
    batch, n = x.shape
    m = Bt.shape[0]
    w_itemsize = jnp.dtype(At.dtype).itemsize
    budget = _vmem_budget_bytes()
    tb, tn = _pick_tiles(batch, n, m, w_itemsize, budget)
    grid = (pl.cdiv(n, tn), pl.cdiv(batch, tb))
    return pl.pallas_call(
        _linear_kernel,
        out_shape=jax.ShapeDtypeStruct((batch, n), x.dtype),
        grid_spec=pltpu.PrefetchScalarGridSpec(
            num_scalar_prefetch=0,
            grid=grid,
            in_specs=[
                pl.BlockSpec((tb, n), lambda j, i: (i, 0)),           # x tile
                pl.BlockSpec((tb, m), lambda j, i: (i, 0)),           # u tile
                pl.BlockSpec((n, tn), lambda j, i: (0, j)),           # A^T column tile
                pl.BlockSpec((m, tn), lambda j, i: (0, j)),           # B^T column tile
            ],
            out_specs=pl.BlockSpec((tb, tn), lambda j, i: (i, j)),
        ),
        compiler_params=pltpu.CompilerParams(
            dimension_semantics=("parallel", "parallel"),
            vmem_limit_bytes=int(budget),
        ),
    )(x, u_val, At, Bt)


# -------------------------------------------- module ------------------------------------------ #

class TanhStateFeedback:
    """u(t, x) = tanh(x @ K^T) + sin(t)  -- controller that the beam kernel can fuse."""

    def __init__(self, K):
        self.K = jnp.asarray(K, jnp.float32)      # kept f32 for exact on-demand evaluation

    def __call__(self, t, x):
        return jnp.tanh(jnp.einsum("ij,bj->bi", self.K, x)) + jnp.sin(t)


class TimoshenkoBeam:
    """Linear discretization of a high-dimensional Timoshenko beam: x_dot = A x + B u."""

    def __init__(self, A, B, u, weight_dtype=jnp.bfloat16):
        self.A = jnp.asarray(A, jnp.float32)
        self.B = jnp.asarray(B, jnp.float32)
        self.u = u                                 # control callable u(t, x) -> (..., n_ctrl)
        # Transposed / cast operators precomputed ONCE (not per ODE step).
        self.At = self.A.T.astype(weight_dtype)    # (n, n)
        self.Bt = self.B.T.astype(weight_dtype)    # (m, n)
        self.b_bias = self.B.T.sum(axis=0, keepdims=True).astype(weight_dtype)  # (1, n) = B @ 1
        self._fused = isinstance(u, TanhStateFeedback)
        self.Kt = self.u.K.T.astype(weight_dtype) if self._fused else None      # (n, m)
        self.nfe = 0
        self.cur_f = None
        self._cur_u = None
        self._cur_tx = None

    # cur_u is recomputed lazily (review #3): the hot kernel does not emit it.
    @property
    def cur_u(self):
        if self._cur_u is None and self._cur_tx is not None:
            t, x = self._cur_tx
            self._cur_u = self.u(t, x)             # exact f32 plain-JAX controller
        return self._cur_u

    @cur_u.setter
    def cur_u(self, value):
        self._cur_u = value

    def forward(self, t, x):
        self.nfe += 1
        t = jnp.asarray(t, jnp.float32)
        if self._fused:
            f = _fused_rhs(t, x, self.At, self.Bt, self.Kt, self.b_bias)
            self._cur_u = None
            self._cur_tx = (t, x)
        else:
            # Generic black-box controller: cannot be fused, evaluate in plain JAX.
            u_val = self.u(t, x)
            self._cur_tx = None
            self._cur_u = u_val
            f = _linear_rhs(x, jnp.asarray(u_val, x.dtype), self.At, self.Bt)
        self.cur_f = f
        return f

    __call__ = forward

    def rollout_euler(self, t0, dt, steps, x0):
        """Integrate x_dot = Ax + Bu with forward Euler entirely on-device (fused path only)."""
        assert self._fused, "on-device rollout requires the fusable TanhStateFeedback controller"
        return _fused_euler_rollout(jnp.asarray(t0, jnp.float32), jnp.asarray(dt, jnp.float32),
                                    x0, self.At, self.Bt, self.Kt, self.b_bias, steps=steps)


if __name__ == "__main__":
    # Deterministic synthetic setup (no checkpoint loading).
    n_state = 128   # beam discretization -> state dimension (lane aligned)
    n_ctrl = 8      # number of actuators
    batch = 16

    key = jax.random.PRNGKey(0)
    kA, kB, kK, kx = jax.random.split(key, 4)

    A = jax.random.normal(kA, (n_state, n_state), dtype=jnp.float32) * 0.05
    B = jax.random.normal(kB, (n_state, n_ctrl), dtype=jnp.float32) * 0.1
    K = jax.random.normal(kK, (n_ctrl, n_state), dtype=jnp.float32) * 0.02
    x = jax.random.normal(kx, (batch, n_state), dtype=jnp.float32)

    t = jnp.float32(0.3)

    # Reference (same semantics as the torch module), f32.
    u_ref = jnp.tanh(jnp.einsum("ij,bj->bi", K, x)) + jnp.sin(t)
    f_ref = jnp.einsum("ij,bj->bi", A, x) + jnp.einsum("ij,bj->bi", B, u_ref)

    # 1) Fused path, f32 weights: tight check against the reference.
    beam_f32 = TimoshenkoBeam(A, B, TanhStateFeedback(K), weight_dtype=jnp.float32)
    f32_out = jax.block_until_ready(beam_f32(t, x))
    assert f32_out.shape == (batch, n_state)
    assert jnp.allclose(f32_out, f_ref, atol=2e-4, rtol=2e-4), "fused f32 kernel mismatch"
    assert jnp.allclose(beam_f32.cur_u, u_ref, atol=2e-4, rtol=2e-4), "lazy cur_u mismatch"

    # 2) Fused hot path, bf16 weights (default): f32 accumulate, validated at bf16 tolerance.
    beam_bf16 = TimoshenkoBeam(A, B, TanhStateFeedback(K))
    f16_out = jax.block_until_ready(beam_bf16(t, x))
    assert jnp.allclose(f16_out, f_ref, atol=5e-2, rtol=5e-2), "fused bf16 kernel mismatch"

    # 3) Generic black-box controller path (unfused fallback), f32 weights.
    beam_gen = TimoshenkoBeam(
        A, B, lambda tt, xx: jnp.tanh(jnp.einsum("ij,bj->bi", K, xx)) + jnp.sin(tt),
        weight_dtype=jnp.float32)
    f_gen = jax.block_until_ready(beam_gen(t, x))
    assert jnp.allclose(f_gen, f_ref, atol=2e-4, rtol=2e-4), "fallback kernel mismatch"

    # 4) On-device Euler rollout (scan over the fused RHS) vs. a plain-JAX Euler loop.
    dt, steps = jnp.float32(1e-3), 8
    x_roll = jax.block_until_ready(beam_f32.rollout_euler(t, dt, steps, x))
    x_ref_roll = x
    for i in range(steps):
        ti = t + i * dt
        ui = jnp.tanh(jnp.einsum("ij,bj->bi", K, x_ref_roll)) + jnp.sin(ti)
        fi = jnp.einsum("ij,bj->bi", A, x_ref_roll) + jnp.einsum("ij,bj->bi", B, ui)
        x_ref_roll = x_ref_roll + dt * fi
    assert jnp.allclose(x_roll, x_ref_roll, atol=1e-3, rtol=1e-3), "rollout mismatch"

    print("KERNEL_OK")
</pallas_src>

<mosaic_0001>
module attributes {stable_mosaic.version = 11 : i64} {
  func.func @_fused_kernel(%arg0: i32, %arg1: i32, %arg2: memref<1xf32, #tpu.memory_space<smem>>, %arg3: memref<16x128xf32, #tpu.memory_space<vmem>>, %arg4: memref<128x128xf32, #tpu.memory_space<vmem>>, %arg5: memref<8x128xf32, #tpu.memory_space<vmem>>, %arg6: memref<128x8xf32, #tpu.memory_space<vmem>>, %arg7: memref<1x128xf32, #tpu.memory_space<vmem>>, %arg8: memref<16x128xf32, #tpu.memory_space<vmem>>) attributes {dimension_semantics = [#tpu.dimension_semantics<parallel>, #tpu.dimension_semantics<parallel>], iteration_bounds = array<i64: 1, 1>, scalar_prefetch = 0 : i64, scratch_operands = 0 : i64, tpu.core_type = #tpu.core_type<tc>, window_params = [{transform_indices = @transform_0, window_bounds = array<i64: 1>}, {transform_indices = @transform_1, window_bounds = array<i64: 16, 128>}, {transform_indices = @transform_2, window_bounds = array<i64: 128, 128>}, {transform_indices = @transform_3, window_bounds = array<i64: 8, 128>}, {pipeline_mode = #tpu.pipeline_mode<synchronous>, transform_indices = @transform_4, window_bounds = array<i64: 128, 8>}, {transform_indices = @transform_5, window_bounds = array<i64: 1, 128>}, {transform_indices = @transform_6, window_bounds = array<i64: 16, 128>}]} {
    %c0 = arith.constant 0 : index
    %c0_0 = arith.constant 0 : index
    %0 = vector.load %arg3[%c0, %c0_0] : memref<16x128xf32, #tpu.memory_space<vmem>>, vector<16x128xf32>
    %c0_1 = arith.constant 0 : index
    %c0_2 = arith.constant 0 : index
    %1 = vector.load %arg6[%c0_1, %c0_2] : memref<128x8xf32, #tpu.memory_space<vmem>>, vector<128x8xf32>
    %cst = arith.constant dense<0.000000e+00> : vector<16x8xf32>
    %2 = tpu.matmul %0, %1, %cst {dimension_numbers = #tpu.dot_dimension_numbers<[1], [0], [0], [1], [0, 0, 1, 1], [], []>} : vector<16x128xf32>, vector<128x8xf32>, vector<16x8xf32> -> vector<16x8xf32>
    %3 = math.tanh %2 : vector<16x8xf32>
    %c0_3 = arith.constant 0 : index
    %c0_4 = arith.constant 0 : index
    %4 = vector.load %arg4[%c0_3, %c0_4] : memref<128x128xf32, #tpu.memory_space<vmem>>, vector<128x128xf32>
    %cst_5 = arith.constant dense<0.000000e+00> : vector<16x128xf32>
    %5 = tpu.matmul %0, %4, %cst_5 {dimension_numbers = #tpu.dot_dimension_numbers<[1], [0], [0], [1], [0, 0, 1, 1], [], []>} : vector<16x128xf32>, vector<128x128xf32>, vector<16x128xf32> -> vector<16x128xf32>
    %c0_6 = arith.constant 0 : index
    %c0_7 = arith.constant 0 : index
    %6 = vector.load %arg5[%c0_6, %c0_7] : memref<8x128xf32, #tpu.memory_space<vmem>>, vector<8x128xf32>
    %cst_8 = arith.constant dense<0.000000e+00> : vector<16x128xf32>
    %7 = tpu.matmul %3, %6, %cst_8 {dimension_numbers = #tpu.dot_dimension_numbers<[1], [0], [0], [1], [0, 0, 1, 1], [], []>} : vector<16x8xf32>, vector<8x128xf32>, vector<16x128xf32> -> vector<16x128xf32>
    %c0_9 = arith.constant 0 : index
    %8 = memref.load %arg2[%c0_9] : memref<1xf32, #tpu.memory_space<smem>>
    %c0_10 = arith.constant 0 : index
    %c0_11 = arith.constant 0 : index
    %9 = vector.load %arg7[%c0_10, %c0_11] : memref<1x128xf32, #tpu.memory_space<vmem>>, vector<1x128xf32>
    %10 = vector.broadcast %8 : f32 to vector<1x128xf32>
    %11 = arith.mulf %10, %9 : vector<1x128xf32>
    %12 = arith.addf %5, %7 : vector<16x128xf32>
    %13 = vector.broadcast %11 : vector<1x128xf32> to vector<16x128xf32>
    %14 = arith.addf %12, %13 : vector<16x128xf32>
    %c0_12 = arith.constant 0 : index
    %c0_13 = arith.constant 0 : index
    %15 = vector.load %arg8[%c0_12, %c0_13] : memref<16x128xf32, #tpu.memory_space<vmem>>, vector<16x128xf32>
    tpu.vector_store %arg8[%c0_12, %c0_13], %14 {strides = array<i32>} : memref<16x128xf32, #tpu.memory_space<vmem>>, vector<16x128xf32>,
    return
  }
  func.func @transform_0(%arg0: i32, %arg1: i32) -> i32 {
    %c0_i32 = arith.constant 0 : i32
    %c0_i32_0 = arith.constant 0 : i32
    return %c0_i32 : i32
  }
  func.func @transform_1(%arg0: i32, %arg1: i32) -> (i32, i32) {
    %c0_i32 = arith.constant 0 : i32
    %c0_i32_0 = arith.constant 0 : i32
    return %arg1, %c0_i32 : i32, i32
  }
  func.func @transform_2(%arg0: i32, %arg1: i32) -> (i32, i32) {
    %c0_i32 = arith.constant 0 : i32
    %c0_i32_0 = arith.constant 0 : i32
    return %c0_i32, %arg0 : i32, i32
  }
  func.func @transform_3(%arg0: i32, %arg1: i32) -> (i32, i32) {
    %c0_i32 = arith.constant 0 : i32
    %c0_i32_0 = arith.constant 0 : i32
    return %c0_i32, %arg0 : i32, i32
  }
  func.func @transform_4(%arg0: i32, %arg1: i32) -> (i32, i32) {
    %c0_i32 = arith.constant 0 : i32
    %c0_i32_0 = arith.constant 0 : i32
    %c0_i32_1 = arith.constant 0 : i32
    return %c0_i32, %c0_i32_0 : i32, i32
  }
  func.func @transform_5(%arg0: i32, %arg1: i32) -> (i32, i32) {
    %c0_i32 = arith.constant 0 : i32
    %c0_i32_0 = arith.constant 0 : i32
    return %c0_i32, %arg0 : i32, i32
  }
  func.func @transform_6(%arg0: i32, %arg1: i32) -> (i32, i32) {
    %c0_i32 = arith.constant 0 : i32
    return %arg1, %arg0 : i32, i32
  }
}

</mosaic_0001>

<llo_original>
// kernel: _fused_rhs.1
$region0: #{_fused_rhs.1}
  #allocation0 [shape = 'u32[]', space=smem, size = 0x4, offset = 0x4, fixed_abs, tag = 'smem constant byte address 0x4 - core index']
  #allocation1 [shape = 'u32[144,128]{1,0:T(1,128)}', space=vmem, size = 0x12000, scoped, tag = 'internal scratch']
  #allocation2 [shape = 'f32[1]{0:T(128)S(6)}', space=smem, size = 0x200, scoped, tag = 'scoped memory for _fused_rhs.1']
  %s0 = inlined_call_operand.<no memory space> [shape: f32[1], index: 0, kind: input, shape index: {}]
  %s1 = inlined_call_operand.vmem [shape: f32[16,128], index: 1, kind: input, shape index: {}]
  %s2 = inlined_call_operand.vmem [shape: f32[128,128], index: 2, kind: input, shape index: {}]
  %s3 = inlined_call_operand.hbm [shape: f32[8,128], index: 3, kind: input, shape index: {}]
  %s4 = inlined_call_operand.vmem [shape: f32[128,8], index: 4, kind: input, shape index: {}]
  %s5 = inlined_call_operand.vmem [shape: f32[1,128], index: 5, kind: input, shape index: {}]
  %s6 = inlined_call_operand.hbm [shape: f32[16,128], index: 6, kind: output, shape index: {}]
  %s7 = sld [smem:[#allocation0]]
  $region38: #{_fused_rhs.1} parent=0
    _
  %s9 = ssub.s32 1, %s7
  %s10 = scalar_select 0, %s9, %s7
  %11 = sst [smem:[#allocation2]] %s0
  $region1: #{_fused_rhs.1} parent=0
    #allocation3 [shape = 'u8[4096]{0}', space=vmem, size = 0x1000, scoped, tag = 'input window, operand 3, single buffered']
    #allocation4 [shape = 's32[1]{0}', space=sflag, size = 0x4, scoped, tag = 'scoped memory for _fused_rhs.1']
    #allocation5 [shape = 's32[1]{0}', space=sflag, size = 0x4, scoped, tag = 'scoped memory for _fused_rhs.1']
    #allocation6 [shape = 'u8[8192]{0}', space=vmem, size = 0x2000, scoped, tag = 'output window, operand 0, single buffered']
    %12 = vsyncpa [#allocation4], 0
    %13 = vsyncpa [#allocation5], 0
    // Predicated region
    $region2: #{_fused_rhs.1} parent=1 // pred_check
      _
    $region3: #{_fused_rhs.1} parent=1 // pred_check_branch
      %15 = sbr.rel (0) target = $region5
    $region4: #{_fused_rhs.1} parent=1 // pred_region
      _
    $region5: #{_fused_rhs.1} parent=1 // pred_fallthru
      _
    // Predicated region
    $region6: #{_fused_rhs.1} parent=1 // pred_check
      _
    $region7: #{_fused_rhs.1} parent=1 // pred_check_branch
      %17 = sbr.rel (0) target = $region9
    $region8: #{_fused_rhs.1} parent=1 // pred_region
      _
    $region9: #{_fused_rhs.1} parent=1 // pred_fallthru
      _
    // Predicated region
    $region10: #{_fused_rhs.1} parent=1 // pred_check
      _
    $region11: #{_fused_rhs.1} parent=1 // pred_check_branch
      %19 = sbr.rel (0) target = $region13
    $region12: #{_fused_rhs.1} parent=1 // pred_region
      _
    $region13: #{_fused_rhs.1} parent=1 // pred_fallthru
      _
    // Predicated region
    $region14: #{_fused_rhs.1} parent=1 // pred_check
      _
    $region15: #{_fused_rhs.1} parent=1 // pred_check_branch
      %21 = sbr.rel (0) target = $region17
    $region16: #{_fused_rhs.1} parent=1 // pred_region
      %s23 = ssub.s32 128, 128
      %24 = vsyncadd [#allocation4], %s23
      %s26 = sshll.u32 [#allocation3], 4
      %s27 = int_to_ptr.vmem [resolvable:$true] %s26
      %29 = dma.hbm_to_vmem [thread:$0]  %s3, 128, %s27, [#allocation4]
    $region17: #{_fused_rhs.1} parent=1 // pred_fallthru
      _
    // Predicated region
    $region18: #{_fused_rhs.1} parent=1 // pred_check
      _
    $region19: #{_fused_rhs.1} parent=1 // pred_check_branch
      %31 = sbr.rel (0) target = $region21
    $region20: #{_fused_rhs.1} parent=1 // pred_region
      _
    $region21: #{_fused_rhs.1} parent=1 // pred_fallthru
      _
    // Predicated region
    $region22: #{_fused_rhs.1} parent=1 // pred_check
      _
    $region23: #{_fused_rhs.1} parent=1 // pred_check_branch
      %33 = sbr.rel (0) target = $region25
    $region24: #{_fused_rhs.1} parent=1 // pred_region
      _
    $region25: #{_fused_rhs.1} parent=1 // pred_fallthru
      _
    // Predicated region
    $region26: #{_fused_rhs.1} parent=1 // pred_check
      _
    $region27: #{_fused_rhs.1} parent=1 // pred_check_branch
      %35 = sbr.rel (0) target = $region29
    $region28: #{_fused_rhs.1} parent=1 // pred_region
      %36 = dma.done [#allocation4], 128
    $region29: #{_fused_rhs.1} parent=1 // pred_fallthru
      _
    %v37 = vld [vmem:[%s1] sm:$0xff]
    %v38 = vld [vmem:[%s1 + $0x8] sm:$0xff]
    %v39 = vld [vmem:[%s4] sm:$0xff]
    %v40 = vld [vmem:[%s4 + $0x8] sm:$0xff]
    %v41 = vld [vmem:[%s4 + $0x10] sm:$0xff]
    %v42 = vld [vmem:[%s4 + $0x18] sm:$0xff]
    %v43 = vld [vmem:[%s4 + $0x20] sm:$0xff]
    %v44 = vld [vmem:[%s4 + $0x28] sm:$0xff]
    %v45 = vld [vmem:[%s4 + $0x30] sm:$0xff]
    %v46 = vld [vmem:[%s4 + $0x38] sm:$0xff]
    %v47 = vld [vmem:[%s4 + $0x40] sm:$0xff]
    %v48 = vld [vmem:[%s4 + $0x48] sm:$0xff]
    %v49 = vld [vmem:[%s4 + $0x50] sm:$0xff]
    %v50 = vld [vmem:[%s4 + $0x58] sm:$0xff]
    %v51 = vld [vmem:[%s4 + $0x60] sm:$0xff]
    %v52 = vld [vmem:[%s4 + $0x68] sm:$0xff]
    %v53 = vld [vmem:[%s4 + $0x70] sm:$0xff]
    %v54 = vld [vmem:[%s4 + $0x78] sm:$0xff]
    %55 = vmatprep.subr.mxu0 0.0
    %56 = vmatpush1.msra.mxu0 %v39
    %57 = vmatprep.subr.mxu0 0.0
    %58 = vmatpush1.msra.mxu0 %v40
    %59 = vmatprep.subr.mxu0 0.0
    %60 = vmatpush1.msra.mxu0 %v41
    %61 = vmatprep.subr.mxu0 0.0
    %62 = vmatpush1.msra.mxu0 %v42
    %63 = vmatprep.subr.mxu0 0.0
    %64 = vmatpush1.msra.mxu0 %v43
    %65 = vmatprep.subr.mxu0 0.0
    %66 = vmatpush1.msra.mxu0 %v44
    %67 = vmatprep.subr.mxu0 0.0
    %68 = vmatpush1.msra.mxu0 %v45
    %69 = vmatprep.subr.mxu0 0.0
    %70 = vmatpush1.msra.mxu0 %v46
    %71 = vmatprep.subr.mxu0 0.0
    %72 = vmatpush1.msra.mxu0 %v47
    %73 = vmatprep.subr.mxu0 0.0
    %74 = vmatpush1.msra.mxu0 %v48
    %75 = vmatprep.subr.mxu0 0.0
    %76 = vmatpush1.msra.mxu0 %v49
    %77 = vmatprep.subr.mxu0 0.0
    %78 = vmatpush1.msra.mxu0 %v50
    %79 = vmatprep.subr.mxu0 0.0
    %80 = vmatpush1.msra.mxu0 %v51
    %81 = vmatprep.subr.mxu0 0.0
    %82 = vmatpush1.msra.mxu0 %v52
    %83 = vmatprep.subr.mxu0 0.0
    %84 = vmatpush1.msra.mxu0 %v53
    %85 = vmatprep.subr.mxu0 0.0
    %86 = vmatpush1.msra.mxu0 %v54
    %87 = vmatprep.subr.mxu0 0.0
    %88 = vmatpush1.msra.mxu0 0.0
    %89 = vmatprep.subr.mxu0 0.0
    %90 = vmatpush1.msra.mxu0 0.0
    %91 = vmatprep.subr.mxu0 0.0
    %92 = vmatpush1.msra.mxu0 0.0
    %93 = vmatprep.subr.mxu0 0.0
    %94 = vmatpush1.msra.mxu0 0.0
    %95 = vmatprep.subr.mxu0 0.0
    %96 = vmatpush1.msra.mxu0 0.0
    %97 = vmatprep.subr.mxu0 0.0
    %98 = vmatpush1.msra.mxu0 0.0
    %99 = vmatprep.subr.mxu0 0.0
    %100 = vmatpush1.msra.mxu0 0.0
    %101 = vmatprep.subr.mxu0 0.0
    %102 = vmatpush1.msra.mxu0 0.0
    %103 = vmatprep.subr.mxu0 0.0
    %104 = vmatpush1.msra.mxu0 0.0
    %105 = vmatprep.subr.mxu0 0.0
    %106 = vmatpush1.msra.mxu0 0.0
    %107 = vmatprep.subr.mxu0 0.0
    %108 = vmatpush1.msra.mxu0 0.0
    %109 = vmatprep.subr.mxu0 0.0
    %110 = vmatpush1.msra.mxu0 0.0
    %111 = vmatprep.subr.mxu0 0.0
    %112 = vmatpush1.msra.mxu0 0.0
    %113 = vmatprep.subr.mxu0 0.0
    %114 = vmatpush1.msra.mxu0 0.0
    %115 = vmatprep.subr.mxu0 0.0
    %116 = vmatpush1.msra.mxu0 0.0
    %117 = vmatprep.subr.mxu0 0.0
    %118 = vmatpush1.msra.mxu0 0.0
    %119 = vmatprep.mubr.f32.mxu0 0.0
    %120 = vmatmul.mubr.f32.gmra.mrb[0].mxu0 %v37
    %v121 = vpop.f32.mrb[0].mxu0
    %v122 = vadd.f32 0.0, %v121
    %v123 = vpop.f32.mrb[0].mxu0
    %124 = vmatprep.mubr.f32.mxu0 0.0
    %125 = vmatmul.mubr.f32.gmra.mrb[0].mxu0 %v38
    %v126 = vpop.f32.mrb[0].mxu0
    %v127 = vadd.f32 0.0, %v126
    %v128 = vpop.f32.mrb[0].mxu0
    %129 = vdwg.mxu0
    %v130 = vtanh.pop %v122
    %v131 = vtanh.pop %v127
    %v132 = vld [vmem:[%s2] sm:$0xff]
    %v133 = vld [vmem:[%s2 + $0x8] sm:$0xff]
    %v134 = vld [vmem:[%s2 + $0x10] sm:$0xff]
    %v135 = vld [vmem:[%s2 + $0x18] sm:$0xff]
    %v136 = vld [vmem:[%s2 + $0x20] sm:$0xff]
    %v137 = vld [vmem:[%s2 + $0x28] sm:$0xff]
    %v138 = vld [vmem:[%s2 + $0x30] sm:$0xff]
    %v139 = vld [vmem:[%s2 + $0x38] sm:$0xff]
    %v140 = vld [vmem:[%s2 + $0x40] sm:$0xff]
    %v141 = vld [vmem:[%s2 + $0x48] sm:$0xff]
    %v142 = vld [vmem:[%s2 + $0x50] sm:$0xff]
    %v143 = vld [vmem:[%s2 + $0x58] sm:$0xff]
    %v144 = vld [vmem:[%s2 + $0x60] sm:$0xff]
    %v145 = vld [vmem:[%s2 + $0x68] sm:$0xff]
    %v146 = vld [vmem:[%s2 + $0x70] sm:$0xff]
    %v147 = vld [vmem:[%s2 + $0x78] sm:$0xff]
    %v148 = vld [vmem:[#allocation3] sm:$0xff]
    %vm149 = vcmask 64512
    %v151 = vsel %vm149, %v130, 0
    %v154 = vsel %vm149, %v131, 0
    %156 = vmatprep.subr.mxu0 0.0
    %157 = vmatpush1.msra.mxu0 %v148
    %158 = vmatprep.subr.mxu0 0.0
    %159 = vmatpush1.msra.mxu0 0.0
    %160 = vmatprep.subr.mxu0 0.0
    %161 = vmatpush1.msra.mxu0 0.0
    %162 = vmatprep.subr.mxu0 0.0
    %163 = vmatpush1.msra.mxu0 0.0
    %164 = vmatprep.subr.mxu0 0.0
    %165 = vmatpush1.msra.mxu0 0.0
    %166 = vmatprep.subr.mxu0 0.0
    %167 = vmatpush1.msra.mxu0 0.0
    %168 = vmatprep.subr.mxu0 0.0
    %169 = vmatpush1.msra.mxu0 0.0
    %170 = vmatprep.subr.mxu0 0.0
    %171 = vmatpush1.msra.mxu0 0.0
    %172 = vmatprep.subr.mxu0 0.0
    %173 = vmatpush1.msra.mxu0 0.0
    %174 = vmatprep.subr.mxu0 0.0
    %175 = vmatpush1.msra.mxu0 0.0
    %176 = vmatprep.subr.mxu0 0.0
    %177 = vmatpush1.msra.mxu0 0.0
    %178 = vmatprep.subr.mxu0 0.0
    %179 = vmatpush1.msra.mxu0 0.0
    %180 = vmatprep.subr.mxu0 0.0
    %181 = vmatpush1.msra.mxu0 0.0
    %182 = vmatprep.subr.mxu0 0.0
    %183 = vmatpush1.msra.mxu0 0.0
    %184 = vmatprep.subr.mxu0 0.0
    %185 = vmatpush1.msra.mxu0 0.0
    %186 = vmatprep.subr.mxu0 0.0
    %187 = vmatpush1.msra.mxu0 0.0
    %188 = vmatprep.subr.mxu0 0.0
    %189 = vmatpush1.msra.mxu0 0.0
    %190 = vmatprep.subr.mxu0 0.0
    %191 = vmatpush1.msra.mxu0 0.0
    %192 = vmatprep.subr.mxu0 0.0
    %193 = vmatpush1.msra.mxu0 0.0
    %194 = vmatprep.subr.mxu0 0.0
    %195 = vmatpush1.msra.mxu0 0.0
    %196 = vmatprep.subr.mxu0 0.0
    %197 = vmatpush1.msra.mxu0 0.0
    %198 = vmatprep.subr.mxu0 0.0
    %199 = vmatpush1.msra.mxu0 0.0
    %200 = vmatprep.subr.mxu0 0.0
    %201 = vmatpush1.msra.mxu0 0.0
    %202 = vmatprep.subr.mxu0 0.0
    %203 = vmatpush1.msra.mxu0 0.0
    %204 = vmatprep.subr.mxu0 0.0
    %205 = vmatpush1.msra.mxu0 0.0
    %206 = vmatprep.subr.mxu0 0.0
    %207 = vmatpush1.msra.mxu0 0.0
    %208 = vmatprep.subr.mxu0 0.0
    %209 = vmatpush1.msra.mxu0 0.0
    %210 = vmatprep.subr.mxu0 0.0
    %211 = vmatpush1.msra.mxu0 0.0
    %212 = vmatprep.subr.mxu0 0.0
    %213 = vmatpush1.msra.mxu0 0.0
    %214 = vmatprep.subr.mxu0 0.0
    %215 = vmatpush1.msra.mxu0 0.0
    %216 = vmatprep.subr.mxu0 0.0
    %217 = vmatpush1.msra.mxu0 0.0
    %218 = vmatprep.subr.mxu0 0.0
    %219 = vmatpush1.msra.mxu0 0.0
    %220 = vmatprep.mubr.f32.mxu0 0.0
    %221 = vmatmul.mubr.f32.gmra.mrb[0].mxu0 %v151
    %v222 = vpop.f32.mrb[0].mxu0
    %v223 = vadd.f32 0.0, %v222
    %v224 = vpop.f32.mrb[0].mxu0
    %225 = vmatprep.mubr.f32.mxu0 0.0
    %226 = vmatmul.mubr.f32.gmra.mrb[0].mxu0 %v154
    %v227 = vpop.f32.mrb[0].mxu0
    %v228 = vadd.f32 0.0, %v227
    %v229 = vpop.f32.mrb[0].mxu0
    %230 = vdwg.mxu0
    %s231 = sld [smem:[#allocation2]]
    %v232 = vld [vmem:[%s5] sm:$0x1]
    %v233 = vstv %s231
    %v234 = vmul.f32 %v233, %v232
    %235 = vmatprep.subr.mxu0 0.0
    %236 = vmatpush1.msra.mxu0 %v132
    %237 = vmatprep.subr.mxu0 0.0
    %238 = vmatpush1.msra.mxu0 %v133
    %239 = vmatprep.subr.mxu0 0.0
    %240 = vmatpush1.msra.mxu0 %v134
    %241 = vmatprep.subr.mxu0 0.0
    %242 = vmatpush1.msra.mxu0 %v135
    %243 = vmatprep.subr.mxu0 0.0
    %244 = vmatpush1.msra.mxu0 %v136
    %245 = vmatprep.subr.mxu0 0.0
    %246 = vmatpush1.msra.mxu0 %v137
    %247 = vmatprep.subr.mxu0 0.0
    %248 = vmatpush1.msra.mxu0 %v138
    %249 = vmatprep.subr.mxu0 0.0
    %250 = vmatpush1.msra.mxu0 %v139
    %251 = vmatprep.subr.mxu0 0.0
    %252 = vmatpush1.msra.mxu0 %v140
    %253 = vmatprep.subr.mxu0 0.0
    %254 = vmatpush1.msra.mxu0 %v141
    %255 = vmatprep.subr.mxu0 0.0
    %256 = vmatpush1.msra.mxu0 %v142
    %257 = vmatprep.subr.mxu0 0.0
    %258 = vmatpush1.msra.mxu0 %v143
    %259 = vmatprep.subr.mxu0 0.0
    %260 = vmatpush1.msra.mxu0 %v144
    %261 = vmatprep.subr.mxu0 0.0
    %262 = vmatpush1.msra.mxu0 %v145
    %263 = vmatprep.subr.mxu0 0.0
    %264 = vmatpush1.msra.mxu0 %v146
    %265 = vmatprep.subr.mxu0 0.0
    %266 = vmatpush1.msra.mxu0 %v147
    %267 = vmatprep.subr.mxu0 0.0
    %268 = vmatpush1.msra.mxu0 0.0
    %269 = vmatprep.subr.mxu0 0.0
    %270 = vmatpush1.msra.mxu0 0.0
    %271 = vmatprep.subr.mxu0 0.0
    %272 = vmatpush1.msra.mxu0 0.0
    %273 = vmatprep.subr.mxu0 0.0
    %274 = vmatpush1.msra.mxu0 0.0
    %275 = vmatprep.subr.mxu0 0.0
    %276 = vmatpush1.msra.mxu0 0.0
    %277 = vmatprep.subr.mxu0 0.0
    %278 = vmatpush1.msra.mxu0 0.0
    %279 = vmatprep.subr.mxu0 0.0
    %280 = vmatpush1.msra.mxu0 0.0
    %281 = vmatprep.subr.mxu0 0.0
    %282 = vmatpush1.msra.mxu0 0.0
    %283 = vmatprep.subr.mxu0 0.0
    %284 = vmatpush1.msra.mxu0 0.0
    %285 = vmatprep.subr.mxu0 0.0
    %286 = vmatpush1.msra.mxu0 0.0
    %287 = vmatprep.subr.mxu0 0.0
    %288 = vmatpush1.msra.mxu0 0.0
    %289 = vmatprep.subr.mxu0 0.0
    %290 = vmatpush1.msra.mxu0 0.0
    %291 = vmatprep.subr.mxu0 0.0
    %292 = vmatpush1.msra.mxu0 0.0
    %293 = vmatprep.subr.mxu0 0.0
    %294 = vmatpush1.msra.mxu0 0.0
    %295 = vmatprep.subr.mxu0 0.0
    %296 = vmatpush1.msra.mxu0 0.0
    %297 = vmatprep.subr.mxu0 0.0
    %298 = vmatpush1.msra.mxu0 0.0
    %299 = vmatprep.mubr.f32.mxu0 0.0
    %300 = vmatmul.mubr.f32.gmra.mrb[0].mxu0 %v37
    %v301 = vpop.f32.mrb[0].mxu0
    %v302 = vadd.f32 %v223, %v301
    %v303 = vpop.f32.mrb[0].mxu0
    %304 = vmatprep.mubr.f32.mxu0 0.0
    %305 = vmatmul.mubr.f32.gmra.mrb[0].mxu0 %v38
    %v306 = vpop.f32.mrb[0].mxu0
    %v307 = vadd.f32 %v228, %v306
    %v308 = vpop.f32.mrb[0].mxu0
    %309 = vdwg.mxu0
    %v311 = vlaneseq
    %v312 = vshrl.u32 %v311, 7
    %v313 = vsub.s32 0, %v312
    %v314 = vrot.slane %v234, %v313
    %v316 = vadd.f32 %v302, %v314
    %v317 = vadd.f32 %v307, %v314
    %318 = vst [vmem:[#allocation6] sm:$0xff] %v316
    %319 = vst [vmem:[#allocation6 + $0x8] sm:$0xff] %v317
    // Predicated region
    $region30: #{_fused_rhs.1} parent=1 // pred_check
      _
    $region31: #{_fused_rhs.1} parent=1 // pred_check_branch
      %321 = sbr.rel (0) target = $region33
    $region32: #{_fused_rhs.1} parent=1 // pred_region
      %s323 = ssub.s32 256, 256
      %324 = vsyncadd [#allocation5], %s323
      %s325 = sshll.u32 [#allocation6], 4
      %s326 = int_to_ptr.vmem [resolvable:$true] %s325
      %331 = dma.vmem_to_hbm [thread:$0]  %s326, 256, %s6, [#allocation5], 128, 128, 8
    $region33: #{_fused_rhs.1} parent=1 // pred_fallthru
      _
    // Predicated region
    $region34: #{_fused_rhs.1} parent=1 // pred_check
      _
    $region35: #{_fused_rhs.1} parent=1 // pred_check_branch
      %333 = sbr.rel (0) target = $region37
    $region36: #{_fused_rhs.1} parent=1 // pred_region
      %334 = dma.done [#allocation5], 256
    $region37: #{_fused_rhs.1} parent=1 // pred_fallthru
      _
    %335 = vsyncpa [#allocation4], 1
    %336 = vsyncpa [#allocation5], 1

</llo_original>
